<compile_context>
chip_gen: v5e
topology: v5e:2x2
jax: 0.10.0
libtpu: 0.0.40
codegen_flags: <defaults>
</compile_context>

<pallas_src>
import functools

import jax
import jax.numpy as jnp
from jax import lax
from jax.experimental import pallas as pl
from jax.experimental.pallas import tpu as pltpu

_LN_EPS = 1e-5  # PyTorch nn.LayerNorm default


def _round_up(x, m):
    return ((x + m - 1) // m) * m


def _cdiv(a, b):
    return -(-a // b)


def _layernorm(x, gamma, beta):
    # One-pass LayerNorm over the last axis, biased variance (matches torch),
    # f32 stats.  sum(x) and sum(x*x) come from the same operand so the two
    # XLU lane reductions can issue back-to-back.
    n_inv = 1.0 / x.shape[-1]
    s1 = jnp.sum(x, axis=-1, keepdims=True)
    s2 = jnp.sum(x * x, axis=-1, keepdims=True)
    mean = s1 * n_inv
    var = jnp.maximum(s2 * n_inv - mean * mean, 0.0)   # clamp cancellation noise
    inv = lax.rsqrt(var + _LN_EPS)
    return (x - mean) * inv * gamma + beta


def critic_kernel(
    state_ref, action_ref,
    w1_ref, b1_ref, g1_ref, be1_ref,
    w2_ref, b2_ref, g2_ref, be2_ref,
    w3_ref, b3_ref, g3_ref, be3_ref,
    wa_ref, ba_ref,
    wq_ref, bq_ref,
    out_ref,
):
    bf16 = jnp.bfloat16

    # ---- action branch on the idle MXU (independent of the state path, so it
    # overlaps under the LayerNorm chain). K = n_actions is tiny; MXU has slack.
    av = jnp.dot(action_ref[...].astype(bf16), wa_ref[...],
                 preferred_element_type=jnp.float32)
    av = jnp.maximum(av + ba_ref[...], 0.0)

    # ---- state branch: fc1 -> LN -> relu --------------------------------
    x = state_ref[...].astype(bf16)
    h = jnp.dot(x, w1_ref[...], preferred_element_type=jnp.float32) + b1_ref[...]
    h = _layernorm(h, g1_ref[...], be1_ref[...])
    h = jnp.maximum(h, 0.0)

    # fc2 -> LN -> relu
    h = jnp.dot(h.astype(bf16), w2_ref[...],
                preferred_element_type=jnp.float32) + b2_ref[...]
    h = _layernorm(h, g2_ref[...], be2_ref[...])
    h = jnp.maximum(h, 0.0)

    # fc3 -> LN   (no relu, per reference forward)
    sv = jnp.dot(h.astype(bf16), w3_ref[...],
                 preferred_element_type=jnp.float32) + b3_ref[...]
    sv = _layernorm(sv, g3_ref[...], be3_ref[...])

    # ---- fuse and q head ---------------------------------------------------
    sav = jnp.maximum(sv + av, 0.0)                     # [TB, fc3] f32

    # q head as wq [1, fc3] x sav [TB, fc3]^T -> lane-dense [1, TB] row on the
    # MXU (same contracting-last-dims pattern as attention scores).
    q_row = lax.dot_general(
        wq_ref[...], sav,
        dimension_numbers=(((1,), (1,)), ((), ())),
        preferred_element_type=jnp.float32) + bq_ref[...]    # [1, TB]
    out_ref[...] = q_row[None, :, :].astype(out_ref.dtype)   # block (1, 1, TB)


def make_critic_params(key, input_dims, fc1_dims, fc2_dims, fc3_dims, n_actions,
                       dtype=jnp.float32):
    """Deterministic init matching the shapes (and roughly the ranges) of the
    PyTorch module's __init__. Linear weights stored already transposed to
    [in, out]; biases / LN params as [1, out]; q-head weight as a [1, fc3] row."""
    ks = jax.random.split(key, 10)

    def uni(k, shape, bound):
        return jax.random.uniform(k, shape, dtype, minval=-bound, maxval=bound)

    f1 = 1.0 / jnp.sqrt(float(fc1_dims))
    f2 = 1.0 / jnp.sqrt(float(fc2_dims))
    f3 = 1.0 / jnp.sqrt(float(fc3_dims))
    f4 = 0.003
    fa = 1.0 / jnp.sqrt(float(n_actions))  # default PyTorch Linear init bound

    return dict(
        w1=uni(ks[0], (input_dims, fc1_dims), f1),
        b1=uni(ks[1], (1, fc1_dims), f1),
        g1=jnp.ones((1, fc1_dims), dtype),
        be1=jnp.zeros((1, fc1_dims), dtype),
        w2=uni(ks[2], (fc1_dims, fc2_dims), f2),
        b2=uni(ks[3], (1, fc2_dims), f2),
        g2=jnp.ones((1, fc2_dims), dtype),
        be2=jnp.zeros((1, fc2_dims), dtype),
        w3=uni(ks[4], (fc2_dims, fc3_dims), f3),
        b3=uni(ks[5], (1, fc3_dims), f3),
        g3=jnp.ones((1, fc3_dims), dtype),
        be3=jnp.zeros((1, fc3_dims), dtype),
        wa=uni(ks[6], (n_actions, fc3_dims), fa),
        ba=uni(ks[7], (1, fc3_dims), fa),
        wq=uni(ks[8], (1, fc3_dims), f4),    # q-head weight as a lane row
        bq=uni(ks[9], (1, 1), f4),
    )


def _tiling(batch, block_batch):
    """Pick (num_tiles, tile_rows, padded_rows) with minimal padding.

    * batch is padded only to a multiple of 8 (sublane), never to a full tile.
    * at least 2 grid steps whenever the 8-aligned batch allows, so the batch
      axis can be split across both TensorCores on v7x.
    * waste is bounded by ~8 rows per tile.
    """
    padded8 = _round_up(max(batch, 1), 8)
    num_tiles = max(1, _cdiv(padded8, block_batch))
    if num_tiles == 1 and padded8 >= 16:
        num_tiles = 2
    tb = _round_up(_cdiv(padded8, num_tiles), 8)
    return num_tiles, tb, num_tiles * tb


@functools.partial(jax.jit, static_argnames=("block_batch", "core_parallel"))
def critic_forward(state, action, params, *, block_batch=1024,
                   core_parallel=False):
    batch = state.shape[0]
    num_tiles, tb, padded = _tiling(batch, block_batch)

    if padded != batch:
        pad = padded - batch
        state = jnp.pad(state, ((0, pad), (0, 0)))
        action = jnp.pad(action, ((0, pad), (0, 0)))

    # bf16 matmul weights (f32 accumulation inside the kernel).
    w1 = params["w1"].astype(jnp.bfloat16)
    w2 = params["w2"].astype(jnp.bfloat16)
    w3 = params["w3"].astype(jnp.bfloat16)
    wa = params["wa"].astype(jnp.bfloat16)

    args = (
        state, action,
        w1, params["b1"], params["g1"], params["be1"],
        w2, params["b2"], params["g2"], params["be2"],
        w3, params["b3"], params["g3"], params["be3"],
        wa, params["ba"],
        params["wq"], params["bq"],
    )

    act_map = lambda i: (i, 0)       # batch-tiled activations
    res_map = lambda i: (0, 0)       # weights stay VMEM-resident across tiles

    in_specs = [
        pl.BlockSpec((tb, state.shape[1]), act_map),
        pl.BlockSpec((tb, action.shape[1]), act_map),
    ] + [pl.BlockSpec(a.shape, res_map) for a in args[2:]]

    # "parallel" is safe everywhere; on v7x pass core_parallel=True to shard
    # the batch grid axis explicitly across the 2 TensorCores.
    sem = pltpu.CORE_PARALLEL if core_parallel else "parallel"

    out = pl.pallas_call(
        critic_kernel,
        out_shape=jax.ShapeDtypeStruct((num_tiles, 1, tb), jnp.float32),
        grid=(num_tiles,),
        in_specs=in_specs,
        # Lane-dense output: one [1, tb] row per tile instead of a [tb, 1]
        # column of masked stores.
        out_specs=pl.BlockSpec((1, 1, tb), lambda i: (i, 0, 0)),
        compiler_params=pltpu.CompilerParams(dimension_semantics=(sem,)),
    )(*args)

    return out.reshape(padded, 1)[:batch]


def _reference_forward(state, action, p, use_bf16=True):
    """Pure-JAX reference. use_bf16=True mirrors the kernel's matmul recipe;
    use_bf16=False is the true f32 PyTorch-style forward."""
    bf16 = jnp.bfloat16

    def ln(x, g, b):
        m = jnp.mean(x, -1, keepdims=True)
        c = x - m
        v = jnp.mean(c * c, -1, keepdims=True)
        return c / jnp.sqrt(v + _LN_EPS) * g + b

    def mm(x, w):
        if use_bf16:
            return jnp.dot(x.astype(bf16), w.astype(bf16),
                           preferred_element_type=jnp.float32)
        return jnp.dot(x, w)

    h = jax.nn.relu(ln(mm(state, p["w1"]) + p["b1"], p["g1"], p["be1"]))
    h = jax.nn.relu(ln(mm(h, p["w2"]) + p["b2"], p["g2"], p["be2"]))
    sv = ln(mm(h, p["w3"]) + p["b3"], p["g3"], p["be3"])
    av = jax.nn.relu(mm(action, p["wa"]) + p["ba"])
    sav = jax.nn.relu(sv + av)
    return jnp.sum(sav * p["wq"], axis=-1, keepdims=True) + p["bq"]


if __name__ == "__main__":
    # Small shapes consistent with the module's forward (batch deliberately not
    # a multiple of the tile to exercise the minimal-padding + 2-tile path).
    batch = 10
    input_dims = 32
    fc1_dims, fc2_dims, fc3_dims = 64, 64, 32
    n_actions = 4

    key = jax.random.PRNGKey(0)
    k_state, k_action, k_params = jax.random.split(key, 3)

    state = jax.random.normal(k_state, (batch, input_dims), jnp.float32)
    action = jax.random.normal(k_action, (batch, n_actions), jnp.float32)
    params = make_critic_params(
        k_params, input_dims, fc1_dims, fc2_dims, fc3_dims, n_actions)

    q = critic_forward(state, action, params)
    q = jax.block_until_ready(q)
    assert q.shape == (batch, 1), q.shape

    # Tight check against a reference using the same bf16-input matmul recipe.
    q_ref = _reference_forward(state, action, params, use_bf16=True)
    max_err = float(jnp.max(jnp.abs(q - q_ref)))
    assert jnp.allclose(q, q_ref, atol=2e-3, rtol=1e-2), max_err

    # Looser check against the true f32 (PyTorch-semantics) forward.
    q_f32 = _reference_forward(state, action, params, use_bf16=False)
    max_err_f32 = float(jnp.max(jnp.abs(q - q_f32)))
    assert jnp.allclose(q, q_f32, atol=5e-3, rtol=5e-2), max_err_f32

    print("KERNEL_OK")
</pallas_src>

<mosaic_0001>
module attributes {stable_mosaic.version = 11 : i64} {
  func.func @critic_kernel(%arg0: i32, %arg1: memref<8x32xf32, #tpu.memory_space<vmem>>, %arg2: memref<8x4xf32, #tpu.memory_space<vmem>>, %arg3: memref<32x64xbf16, #tpu.memory_space<vmem>>, %arg4: memref<1x64xf32, #tpu.memory_space<vmem>>, %arg5: memref<1x64xf32, #tpu.memory_space<vmem>>, %arg6: memref<1x64xf32, #tpu.memory_space<vmem>>, %arg7: memref<64x64xbf16, #tpu.memory_space<vmem>>, %arg8: memref<1x64xf32, #tpu.memory_space<vmem>>, %arg9: memref<1x64xf32, #tpu.memory_space<vmem>>, %arg10: memref<1x64xf32, #tpu.memory_space<vmem>>, %arg11: memref<64x32xbf16, #tpu.memory_space<vmem>>, %arg12: memref<1x32xf32, #tpu.memory_space<vmem>>, %arg13: memref<1x32xf32, #tpu.memory_space<vmem>>, %arg14: memref<1x32xf32, #tpu.memory_space<vmem>>, %arg15: memref<4x32xbf16, #tpu.memory_space<vmem>>, %arg16: memref<1x32xf32, #tpu.memory_space<vmem>>, %arg17: memref<1x32xf32, #tpu.memory_space<vmem>>, %arg18: memref<1x1xf32, #tpu.memory_space<vmem>>, %arg19: memref<1x1x8xf32, #tpu.memory_space<vmem>>) attributes {dimension_semantics = [#tpu.dimension_semantics<parallel>], iteration_bounds = array<i64: 2>, scalar_prefetch = 0 : i64, scratch_operands = 0 : i64, tpu.core_type = #tpu.core_type<tc>, window_params = [{transform_indices = @transform_0, window_bounds = array<i64: 8, 32>}, {transform_indices = @transform_1, window_bounds = array<i64: 8, 4>}, {pipeline_mode = #tpu.pipeline_mode<synchronous>, transform_indices = @transform_2, window_bounds = array<i64: 32, 64>}, {pipeline_mode = #tpu.pipeline_mode<synchronous>, transform_indices = @transform_3, window_bounds = array<i64: 1, 64>}, {pipeline_mode = #tpu.pipeline_mode<synchronous>, transform_indices = @transform_4, window_bounds = array<i64: 1, 64>}, {pipeline_mode = #tpu.pipeline_mode<synchronous>, transform_indices = @transform_5, window_bounds = array<i64: 1, 64>}, {pipeline_mode = #tpu.pipeline_mode<synchronous>, transform_indices = @transform_6, window_bounds = array<i64: 64, 64>}, {pipeline_mode = #tpu.pipeline_mode<synchronous>, transform_indices = @transform_7, window_bounds = array<i64: 1, 64>}, {pipeline_mode = #tpu.pipeline_mode<synchronous>, transform_indices = @transform_8, window_bounds = array<i64: 1, 64>}, {pipeline_mode = #tpu.pipeline_mode<synchronous>, transform_indices = @transform_9, window_bounds = array<i64: 1, 64>}, {pipeline_mode = #tpu.pipeline_mode<synchronous>, transform_indices = @transform_10, window_bounds = array<i64: 64, 32>}, {pipeline_mode = #tpu.pipeline_mode<synchronous>, transform_indices = @transform_11, window_bounds = array<i64: 1, 32>}, {pipeline_mode = #tpu.pipeline_mode<synchronous>, transform_indices = @transform_12, window_bounds = array<i64: 1, 32>}, {pipeline_mode = #tpu.pipeline_mode<synchronous>, transform_indices = @transform_13, window_bounds = array<i64: 1, 32>}, {pipeline_mode = #tpu.pipeline_mode<synchronous>, transform_indices = @transform_14, window_bounds = array<i64: 4, 32>}, {pipeline_mode = #tpu.pipeline_mode<synchronous>, transform_indices = @transform_15, window_bounds = array<i64: 1, 32>}, {pipeline_mode = #tpu.pipeline_mode<synchronous>, transform_indices = @transform_16, window_bounds = array<i64: 1, 32>}, {pipeline_mode = #tpu.pipeline_mode<synchronous>, transform_indices = @transform_17, window_bounds = array<i64: 1, 1>}, {transform_indices = @transform_18, window_bounds = array<i64: 1, 1, 8>}]} {
    %c0 = arith.constant 0 : index
    %c0_0 = arith.constant 0 : index
    %0 = vector.load %arg2[%c0, %c0_0] : memref<8x4xf32, #tpu.memory_space<vmem>>, vector<8x4xf32>
    %1 = arith.truncf %0 : vector<8x4xf32> to vector<8x4xbf16>
    %c0_1 = arith.constant 0 : index
    %c0_2 = arith.constant 0 : index
    %2 = vector.load %arg15[%c0_1, %c0_2] : memref<4x32xbf16, #tpu.memory_space<vmem>>, vector<4x32xbf16>
    %cst = arith.constant dense<0.000000e+00> : vector<8x32xf32>
    %3 = tpu.matmul %1, %2, %cst {dimension_numbers = #tpu.dot_dimension_numbers<[1], [0], [0], [1], [0, 0, 1, 1], [], []>} : vector<8x4xbf16>, vector<4x32xbf16>, vector<8x32xf32> -> vector<8x32xf32>
    %c0_3 = arith.constant 0 : index
    %c0_4 = arith.constant 0 : index
    %4 = vector.load %arg16[%c0_3, %c0_4] : memref<1x32xf32, #tpu.memory_space<vmem>>, vector<1x32xf32>
    %5 = vector.broadcast %4 : vector<1x32xf32> to vector<8x32xf32>
    %6 = arith.addf %3, %5 : vector<8x32xf32>
    %cst_5 = arith.constant 0.000000e+00 : f32
    %7 = vector.broadcast %cst_5 : f32 to vector<8x32xf32>
    %8 = arith.maximumf %6, %7 : vector<8x32xf32>
    %c0_6 = arith.constant 0 : index
    %c0_7 = arith.constant 0 : index
    %9 = vector.load %arg1[%c0_6, %c0_7] : memref<8x32xf32, #tpu.memory_space<vmem>>, vector<8x32xf32>
    %10 = arith.truncf %9 : vector<8x32xf32> to vector<8x32xbf16>
    %c0_8 = arith.constant 0 : index
    %c0_9 = arith.constant 0 : index
    %11 = vector.load %arg3[%c0_8, %c0_9] : memref<32x64xbf16, #tpu.memory_space<vmem>>, vector<32x64xbf16>
    %cst_10 = arith.constant dense<0.000000e+00> : vector<8x64xf32>
    %12 = tpu.matmul %10, %11, %cst_10 {dimension_numbers = #tpu.dot_dimension_numbers<[1], [0], [0], [1], [0, 0, 1, 1], [], []>} : vector<8x32xbf16>, vector<32x64xbf16>, vector<8x64xf32> -> vector<8x64xf32>
    %c0_11 = arith.constant 0 : index
    %c0_12 = arith.constant 0 : index
    %13 = vector.load %arg4[%c0_11, %c0_12] : memref<1x64xf32, #tpu.memory_space<vmem>>, vector<1x64xf32>
    %14 = vector.broadcast %13 : vector<1x64xf32> to vector<8x64xf32>
    %15 = arith.addf %12, %14 : vector<8x64xf32>
    %c0_13 = arith.constant 0 : index
    %c0_14 = arith.constant 0 : index
    %16 = vector.load %arg5[%c0_13, %c0_14] : memref<1x64xf32, #tpu.memory_space<vmem>>, vector<1x64xf32>
    %c0_15 = arith.constant 0 : index
    %c0_16 = arith.constant 0 : index
    %17 = vector.load %arg6[%c0_15, %c0_16] : memref<1x64xf32, #tpu.memory_space<vmem>>, vector<1x64xf32>
    %cst_17 = arith.constant dense<0.000000e+00> : vector<8xf32>
    %18 = vector.multi_reduction <add>, %15, %cst_17 [1] : vector<8x64xf32> to vector<8xf32>
    %19 = vector.shape_cast %18 : vector<8xf32> to vector<8x1xf32>
    %20 = arith.mulf %15, %15 : vector<8x64xf32>
    %cst_18 = arith.constant dense<0.000000e+00> : vector<8xf32>
    %21 = vector.multi_reduction <add>, %20, %cst_18 [1] : vector<8x64xf32> to vector<8xf32>
    %22 = vector.shape_cast %21 : vector<8xf32> to vector<8x1xf32>
    %cst_19 = arith.constant 1.562500e-02 : f32
    %23 = vector.broadcast %cst_19 : f32 to vector<8x1xf32>
    %24 = arith.mulf %19, %23 : vector<8x1xf32>
    %cst_20 = arith.constant 1.562500e-02 : f32
    %25 = vector.broadcast %cst_20 : f32 to vector<8x1xf32>
    %26 = arith.mulf %22, %25 : vector<8x1xf32>
    %27 = arith.mulf %24, %24 : vector<8x1xf32>
    %28 = arith.subf %26, %27 : vector<8x1xf32>
    %cst_21 = arith.constant 0.000000e+00 : f32
    %29 = vector.broadcast %cst_21 : f32 to vector<8x1xf32>
    %30 = arith.maximumf %28, %29 : vector<8x1xf32>
    %cst_22 = arith.constant 9.99999974E-6 : f32
    %31 = vector.broadcast %cst_22 : f32 to vector<8x1xf32>
    %32 = arith.addf %30, %31 : vector<8x1xf32>
    %33 = math.rsqrt %32 : vector<8x1xf32>
    %34 = vector.broadcast %24 : vector<8x1xf32> to vector<8x64xf32>
    %35 = arith.subf %15, %34 : vector<8x64xf32>
    %36 = vector.broadcast %33 : vector<8x1xf32> to vector<8x64xf32>
    %37 = arith.mulf %35, %36 : vector<8x64xf32>
    %38 = vector.broadcast %16 : vector<1x64xf32> to vector<8x64xf32>
    %39 = arith.mulf %37, %38 : vector<8x64xf32>
    %40 = vector.broadcast %17 : vector<1x64xf32> to vector<8x64xf32>
    %41 = arith.addf %39, %40 : vector<8x64xf32>
    %cst_23 = arith.constant 0.000000e+00 : f32
    %42 = vector.broadcast %cst_23 : f32 to vector<8x64xf32>
    %43 = arith.maximumf %41, %42 : vector<8x64xf32>
    %44 = arith.truncf %43 : vector<8x64xf32> to vector<8x64xbf16>
    %c0_24 = arith.constant 0 : index
    %c0_25 = arith.constant 0 : index
    %45 = vector.load %arg7[%c0_24, %c0_25] : memref<64x64xbf16, #tpu.memory_space<vmem>>, vector<64x64xbf16>
    %cst_26 = arith.constant dense<0.000000e+00> : vector<8x64xf32>
    %46 = tpu.matmul %44, %45, %cst_26 {dimension_numbers = #tpu.dot_dimension_numbers<[1], [0], [0], [1], [0, 0, 1, 1], [], []>} : vector<8x64xbf16>, vector<64x64xbf16>, vector<8x64xf32> -> vector<8x64xf32>
    %c0_27 = arith.constant 0 : index
    %c0_28 = arith.constant 0 : index
    %47 = vector.load %arg8[%c0_27, %c0_28] : memref<1x64xf32, #tpu.memory_space<vmem>>, vector<1x64xf32>
    %48 = vector.broadcast %47 : vector<1x64xf32> to vector<8x64xf32>
    %49 = arith.addf %46, %48 : vector<8x64xf32>
    %c0_29 = arith.constant 0 : index
    %c0_30 = arith.constant 0 : index
    %50 = vector.load %arg9[%c0_29, %c0_30] : memref<1x64xf32, #tpu.memory_space<vmem>>, vector<1x64xf32>
    %c0_31 = arith.constant 0 : index
    %c0_32 = arith.constant 0 : index
    %51 = vector.load %arg10[%c0_31, %c0_32] : memref<1x64xf32, #tpu.memory_space<vmem>>, vector<1x64xf32>
    %cst_33 = arith.constant dense<0.000000e+00> : vector<8xf32>
    %52 = vector.multi_reduction <add>, %49, %cst_33 [1] : vector<8x64xf32> to vector<8xf32>
    %53 = vector.shape_cast %52 : vector<8xf32> to vector<8x1xf32>
    %54 = arith.mulf %49, %49 : vector<8x64xf32>
    %cst_34 = arith.constant dense<0.000000e+00> : vector<8xf32>
    %55 = vector.multi_reduction <add>, %54, %cst_34 [1] : vector<8x64xf32> to vector<8xf32>
    %56 = vector.shape_cast %55 : vector<8xf32> to vector<8x1xf32>
    %cst_35 = arith.constant 1.562500e-02 : f32
    %57 = vector.broadcast %cst_35 : f32 to vector<8x1xf32>
    %58 = arith.mulf %53, %57 : vector<8x1xf32>
    %cst_36 = arith.constant 1.562500e-02 : f32
    %59 = vector.broadcast %cst_36 : f32 to vector<8x1xf32>
    %60 = arith.mulf %56, %59 : vector<8x1xf32>
    %61 = arith.mulf %58, %58 : vector<8x1xf32>
    %62 = arith.subf %60, %61 : vector<8x1xf32>
    %cst_37 = arith.constant 0.000000e+00 : f32
    %63 = vector.broadcast %cst_37 : f32 to vector<8x1xf32>
    %64 = arith.maximumf %62, %63 : vector<8x1xf32>
    %cst_38 = arith.constant 9.99999974E-6 : f32
    %65 = vector.broadcast %cst_38 : f32 to vector<8x1xf32>
    %66 = arith.addf %64, %65 : vector<8x1xf32>
    %67 = math.rsqrt %66 : vector<8x1xf32>
    %68 = vector.broadcast %58 : vector<8x1xf32> to vector<8x64xf32>
    %69 = arith.subf %49, %68 : vector<8x64xf32>
    %70 = vector.broadcast %67 : vector<8x1xf32> to vector<8x64xf32>
    %71 = arith.mulf %69, %70 : vector<8x64xf32>
    %72 = vector.broadcast %50 : vector<1x64xf32> to vector<8x64xf32>
    %73 = arith.mulf %71, %72 : vector<8x64xf32>
    %74 = vector.broadcast %51 : vector<1x64xf32> to vector<8x64xf32>
    %75 = arith.addf %73, %74 : vector<8x64xf32>
    %cst_39 = arith.constant 0.000000e+00 : f32
    %76 = vector.broadcast %cst_39 : f32 to vector<8x64xf32>
    %77 = arith.maximumf %75, %76 : vector<8x64xf32>
    %78 = arith.truncf %77 : vector<8x64xf32> to vector<8x64xbf16>
    %c0_40 = arith.constant 0 : index
    %c0_41 = arith.constant 0 : index
    %79 = vector.load %arg11[%c0_40, %c0_41] : memref<64x32xbf16, #tpu.memory_space<vmem>>, vector<64x32xbf16>
    %cst_42 = arith.constant dense<0.000000e+00> : vector<8x32xf32>
    %80 = tpu.matmul %78, %79, %cst_42 {dimension_numbers = #tpu.dot_dimension_numbers<[1], [0], [0], [1], [0, 0, 1, 1], [], []>} : vector<8x64xbf16>, vector<64x32xbf16>, vector<8x32xf32> -> vector<8x32xf32>
    %c0_43 = arith.constant 0 : index
    %c0_44 = arith.constant 0 : index
    %81 = vector.load %arg12[%c0_43, %c0_44] : memref<1x32xf32, #tpu.memory_space<vmem>>, vector<1x32xf32>
    %82 = vector.broadcast %81 : vector<1x32xf32> to vector<8x32xf32>
    %83 = arith.addf %80, %82 : vector<8x32xf32>
    %c0_45 = arith.constant 0 : index
    %c0_46 = arith.constant 0 : index
    %84 = vector.load %arg13[%c0_45, %c0_46] : memref<1x32xf32, #tpu.memory_space<vmem>>, vector<1x32xf32>
    %c0_47 = arith.constant 0 : index
    %c0_48 = arith.constant 0 : index
    %85 = vector.load %arg14[%c0_47, %c0_48] : memref<1x32xf32, #tpu.memory_space<vmem>>, vector<1x32xf32>
    %cst_49 = arith.constant dense<0.000000e+00> : vector<8xf32>
    %86 = vector.multi_reduction <add>, %83, %cst_49 [1] : vector<8x32xf32> to vector<8xf32>
    %87 = vector.shape_cast %86 : vector<8xf32> to vector<8x1xf32>
    %88 = arith.mulf %83, %83 : vector<8x32xf32>
    %cst_50 = arith.constant dense<0.000000e+00> : vector<8xf32>
    %89 = vector.multi_reduction <add>, %88, %cst_50 [1] : vector<8x32xf32> to vector<8xf32>
    %90 = vector.shape_cast %89 : vector<8xf32> to vector<8x1xf32>
    %cst_51 = arith.constant 3.125000e-02 : f32
    %91 = vector.broadcast %cst_51 : f32 to vector<8x1xf32>
    %92 = arith.mulf %87, %91 : vector<8x1xf32>
    %cst_52 = arith.constant 3.125000e-02 : f32
    %93 = vector.broadcast %cst_52 : f32 to vector<8x1xf32>
    %94 = arith.mulf %90, %93 : vector<8x1xf32>
    %95 = arith.mulf %92, %92 : vector<8x1xf32>
    %96 = arith.subf %94, %95 : vector<8x1xf32>
    %cst_53 = arith.constant 0.000000e+00 : f32
    %97 = vector.broadcast %cst_53 : f32 to vector<8x1xf32>
    %98 = arith.maximumf %96, %97 : vector<8x1xf32>
    %cst_54 = arith.constant 9.99999974E-6 : f32
    %99 = vector.broadcast %cst_54 : f32 to vector<8x1xf32>
    %100 = arith.addf %98, %99 : vector<8x1xf32>
    %101 = math.rsqrt %100 : vector<8x1xf32>
    %102 = vector.broadcast %92 : vector<8x1xf32> to vector<8x32xf32>
    %103 = arith.subf %83, %102 : vector<8x32xf32>
    %104 = vector.broadcast %101 : vector<8x1xf32> to vector<8x32xf32>
    %105 = arith.mulf %103, %104 : vector<8x32xf32>
    %106 = vector.broadcast %84 : vector<1x32xf32> to vector<8x32xf32>
    %107 = arith.mulf %105, %106 : vector<8x32xf32>
    %108 = vector.broadcast %85 : vector<1x32xf32> to vector<8x32xf32>
    %109 = arith.addf %107, %108 : vector<8x32xf32>
    %110 = arith.addf %109, %8 : vector<8x32xf32>
    %cst_55 = arith.constant 0.000000e+00 : f32
    %111 = vector.broadcast %cst_55 : f32 to vector<8x32xf32>
    %112 = arith.maximumf %110, %111 : vector<8x32xf32>
    %c0_56 = arith.constant 0 : index
    %c0_57 = arith.constant 0 : index
    %113 = vector.load %arg17[%c0_56, %c0_57] : memref<1x32xf32, #tpu.memory_space<vmem>>, vector<1x32xf32>
    %cst_58 = arith.constant dense<0.000000e+00> : vector<1x8xf32>
    %114 = tpu.matmul %113, %112, %cst_58 {dimension_numbers = #tpu.dot_dimension_numbers<[1], [1], [0], [0], [0, 0, 1, 0], [], []>} : vector<1x32xf32>, vector<8x32xf32>, vector<1x8xf32> -> vector<1x8xf32>
    %c0_59 = arith.constant 0 : index
    %c0_60 = arith.constant 0 : index
    %115 = vector.load %arg18[%c0_59, %c0_60] : memref<1x1xf32, #tpu.memory_space<vmem>>, vector<1x1xf32>
    %116 = vector.broadcast %115 : vector<1x1xf32> to vector<1x8xf32>
    %117 = arith.addf %114, %116 : vector<1x8xf32>
    %118 = vector.shape_cast %117 : vector<1x8xf32> to vector<1x1x8xf32>
    %c0_61 = arith.constant 0 : index
    %c0_62 = arith.constant 0 : index
    %c0_63 = arith.constant 0 : index
    %119 = vector.load %arg19[%c0_61, %c0_62, %c0_63] : memref<1x1x8xf32, #tpu.memory_space<vmem>>, vector<1x1x8xf32>
    tpu.vector_store %arg19[%c0_61, %c0_62, %c0_63], %118 {strides = array<i32>} : memref<1x1x8xf32, #tpu.memory_space<vmem>>, vector<1x1x8xf32>,
    return
  }
  func.func @transform_0(%arg0: i32) -> (i32, i32) {
    %c0_i32 = arith.constant 0 : i32
    %c0_i32_0 = arith.constant 0 : i32
    return %arg0, %c0_i32 : i32, i32
  }
  func.func @transform_1(%arg0: i32) -> (i32, i32) {
    %c0_i32 = arith.constant 0 : i32
    %c0_i32_0 = arith.constant 0 : i32
    return %arg0, %c0_i32 : i32, i32
  }
  func.func @transform_2(%arg0: i32) -> (i32, i32) {
    %c0_i32 = arith.constant 0 : i32
    %c0_i32_0 = arith.constant 0 : i32
    %c0_i32_1 = arith.constant 0 : i32
    return %c0_i32, %c0_i32_0 : i32, i32
  }
  func.func @transform_3(%arg0: i32) -> (i32, i32) {
    %c0_i32 = arith.constant 0 : i32
    %c0_i32_0 = arith.constant 0 : i32
    %c0_i32_1 = arith.constant 0 : i32
    return %c0_i32, %c0_i32_0 : i32, i32
  }
  func.func @transform_4(%arg0: i32) -> (i32, i32) {
    %c0_i32 = arith.constant 0 : i32
    %c0_i32_0 = arith.constant 0 : i32
    %c0_i32_1 = arith.constant 0 : i32
    return %c0_i32, %c0_i32_0 : i32, i32
  }
  func.func @transform_5(%arg0: i32) -> (i32, i32) {
    %c0_i32 = arith.constant 0 : i32
    %c0_i32_0 = arith.constant 0 : i32
    %c0_i32_1 = arith.constant 0 : i32
    return %c0_i32, %c0_i32_0 : i32, i32
  }
  func.func @transform_6(%arg0: i32) -> (i32, i32) {
    %c0_i32 = arith.constant 0 : i32
    %c0_i32_0 = arith.constant 0 : i32
    %c0_i32_1 = arith.constant 0 : i32
    return %c0_i32, %c0_i32_0 : i32, i32
  }
  func.func @transform_7(%arg0: i32) -> (i32, i32) {
    %c0_i32 = arith.constant 0 : i32
    %c0_i32_0 = arith.constant 0 : i32
    %c0_i32_1 = arith.constant 0 : i32
    return %c0_i32, %c0_i32_0 : i32, i32
  }
  func.func @transform_8(%arg0: i32) -> (i32, i32) {
    %c0_i32 = arith.constant 0 : i32
    %c0_i32_0 = arith.constant 0 : i32
    %c0_i32_1 = arith.constant 0 : i32
    return %c0_i32, %c0_i32_0 : i32, i32
  }
  func.func @transform_9(%arg0: i32) -> (i32, i32) {
    %c0_i32 = arith.constant 0 : i32
    %c0_i32_0 = arith.constant 0 : i32
    %c0_i32_1 = arith.constant 0 : i32
    return %c0_i32, %c0_i32_0 : i32, i32
  }
  func.func @transform_10(%arg0: i32) -> (i32, i32) {
    %c0_i32 = arith.constant 0 : i32
    %c0_i32_0 = arith.constant 0 : i32
    %c0_i32_1 = arith.constant 0 : i32
    return %c0_i32, %c0_i32_0 : i32, i32
  }
  func.func @transform_11(%arg0: i32) -> (i32, i32) {
    %c0_i32 = arith.constant 0 : i32
    %c0_i32_0 = arith.constant 0 : i32
    %c0_i32_1 = arith.constant 0 : i32
    return %c0_i32, %c0_i32_0 : i32, i32
  }
  func.func @transform_12(%arg0: i32) -> (i32, i32) {
    %c0_i32 = arith.constant 0 : i32
    %c0_i32_0 = arith.constant 0 : i32
    %c0_i32_1 = arith.constant 0 : i32
    return %c0_i32, %c0_i32_0 : i32, i32
  }
  func.func @transform_13(%arg0: i32) -> (i32, i32) {
    %c0_i32 = arith.constant 0 : i32
    %c0_i32_0 = arith.constant 0 : i32
    %c0_i32_1 = arith.constant 0 : i32
    return %c0_i32, %c0_i32_0 : i32, i32
  }
  func.func @transform_14(%arg0: i32) -> (i32, i32) {
    %c0_i32 = arith.constant 0 : i32
    %c0_i32_0 = arith.constant 0 : i32
    %c0_i32_1 = arith.constant 0 : i32
    return %c0_i32, %c0_i32_0 : i32, i32
  }
  func.func @transform_15(%arg0: i32) -> (i32, i32) {
    %c0_i32 = arith.constant 0 : i32
    %c0_i32_0 = arith.constant 0 : i32
    %c0_i32_1 = arith.constant 0 : i32
    return %c0_i32, %c0_i32_0 : i32, i32
  }
  func.func @transform_16(%arg0: i32) -> (i32, i32) {
    %c0_i32 = arith.constant 0 : i32
    %c0_i32_0 = arith.constant 0 : i32
    %c0_i32_1 = arith.constant 0 : i32
    return %c0_i32, %c0_i32_0 : i32, i32
  }
  func.func @transform_17(%arg0: i32) -> (i32, i32) {
    %c0_i32 = arith.constant 0 : i32
    %c0_i32_0 = arith.constant 0 : i32
    %c0_i32_1 = arith.constant 0 : i32
    return %c0_i32, %c0_i32_0 : i32, i32
  }
  func.func @transform_18(%arg0: i32) -> (i32, i32, i32) {
    %c0_i32 = arith.constant 0 : i32
    %c0_i32_0 = arith.constant 0 : i32
    %c0_i32_1 = arith.constant 0 : i32
    return %arg0, %c0_i32, %c0_i32_0 : i32, i32, i32
  }
}

</mosaic_0001>

<llo_original>
// kernel: critic_forward.1
$region0: #{critic_forward.1}
  #allocation0 [shape = 'u32[]', space=smem, size = 0x4, offset = 0x4, fixed_abs, tag = 'smem constant byte address 0x4 - core index']
  #allocation1 [shape = 'u32[72,128]{1,0:T(1,128)}', space=vmem, size = 0x9000, scoped, tag = 'internal scratch']
  #allocation2 [shape = 'f32[1,1]{1,0:T(1,128)S(1)}', space=vmem, size = 0x200, scoped, tag = 'scoped memory for critic_forward.1']
  %s0 = inlined_call_operand.vmem [shape: f32[16,32], index: 0, kind: input, shape index: {}]
  %s1 = inlined_call_operand.vmem [shape: f32[16,4], index: 1, kind: input, shape index: {}]
  %s2 = inlined_call_operand.vmem [shape: bf16[32,64], index: 2, kind: input, shape index: {}]
  %s3 = inlined_call_operand.vmem [shape: f32[1,64], index: 3, kind: input, shape index: {}]
  %s4 = inlined_call_operand.vmem [shape: f32[1,64], index: 4, kind: input, shape index: {}]
  %s5 = inlined_call_operand.vmem [shape: f32[1,64], index: 5, kind: input, shape index: {}]
  %s6 = inlined_call_operand.vmem [shape: bf16[64,64], index: 6, kind: input, shape index: {}]
  %s7 = inlined_call_operand.vmem [shape: f32[1,64], index: 7, kind: input, shape index: {}]
  %s8 = inlined_call_operand.vmem [shape: f32[1,64], index: 8, kind: input, shape index: {}]
  %s9 = inlined_call_operand.vmem [shape: f32[1,64], index: 9, kind: input, shape index: {}]
  %s10 = inlined_call_operand.vmem [shape: bf16[64,32], index: 10, kind: input, shape index: {}]
  %s11 = inlined_call_operand.vmem [shape: f32[1,32], index: 11, kind: input, shape index: {}]
  %s12 = inlined_call_operand.vmem [shape: f32[1,32], index: 12, kind: input, shape index: {}]
  %s13 = inlined_call_operand.vmem [shape: f32[1,32], index: 13, kind: input, shape index: {}]
  %s14 = inlined_call_operand.vmem [shape: bf16[4,32], index: 14, kind: input, shape index: {}]
  %s15 = inlined_call_operand.vmem [shape: f32[1,32], index: 15, kind: input, shape index: {}]
  %s16 = inlined_call_operand.vmem [shape: f32[1,32], index: 16, kind: input, shape index: {}]
  %s17 = inlined_call_operand.<no memory space> [shape: f32[1,1], index: 17, kind: input, shape index: {}]
  %s18 = inlined_call_operand.vmem [shape: f32[2,1,8], index: 18, kind: output, shape index: {}]
  %s19 = sld [smem:[#allocation0]]
  $region105: #{critic_forward.1} parent=0
    _
  %s21 = ssub.s32 1, %s19
  %s22 = scalar_select 0, %s21, %s19
  %v23 = vstv %s17
  %24 = vst [vmem:[#allocation2] sm:$0x1] %v23
  loop: start=0, step=1, limit=4
  $region2: #{critic_forward.1} parent=0 // loop_pre_header
    _
  $region3: #{critic_forward.1} parent=0 // loop_header
    %s26 = sphi 0, %s30
    %p27 = scmp.ge.s32.totalorder %s26, 4
    %s36 = sphi 0, %s38
    %s39 = sphi 0, %s36
    %s40 = sphi 0, %s39
    %s56 = sphi 0, %s40
    %s62 = sphi 0, %s64
    %s65 = sphi 0, %s62
    %s66 = sphi 0, %s65
    %s82 = sphi 0, %s66
    %s86 = sphi 0, %s86
    %s88 = sphi 0, %s86
    %s89 = sphi 0, %s88
    %s103 = sphi 0, %s89
    %s107 = sphi 0, %s107
    %s109 = sphi 0, %s107
    %s110 = sphi 0, %s109
    %s124 = sphi 0, %s110
    %s128 = sphi 0, %s128
    %s130 = sphi 0, %s128
    %s131 = sphi 0, %s130
    %s145 = sphi 0, %s131
    %s149 = sphi 0, %s149
    %s151 = sphi 0, %s149
    %s152 = sphi 0, %s151
    %s166 = sphi 0, %s152
    %s170 = sphi 0, %s170
    %s172 = sphi 0, %s170
    %s173 = sphi 0, %s172
    %s187 = sphi 0, %s173
    %s191 = sphi 0, %s191
    %s193 = sphi 0, %s191
    %s194 = sphi 0, %s193
    %s208 = sphi 0, %s194
    %s212 = sphi 0, %s212
    %s214 = sphi 0, %s212
    %s215 = sphi 0, %s214
    %s229 = sphi 0, %s215
    %s233 = sphi 0, %s233
    %s235 = sphi 0, %s233
    %s236 = sphi 0, %s235
    %s250 = sphi 0, %s236
    %s254 = sphi 0, %s254
    %s256 = sphi 0, %s254
    %s257 = sphi 0, %s256
    %s271 = sphi 0, %s257
    %s275 = sphi 0, %s275
    %s277 = sphi 0, %s275
    %s278 = sphi 0, %s277
    %s292 = sphi 0, %s278
    %s296 = sphi 0, %s296
    %s298 = sphi 0, %s296
    %s299 = sphi 0, %s298
    %s313 = sphi 0, %s299
    %s317 = sphi 0, %s317
    %s319 = sphi 0, %s317
    %s320 = sphi 0, %s319
    %s334 = sphi 0, %s320
    %s338 = sphi 0, %s338
    %s340 = sphi 0, %s338
    %s341 = sphi 0, %s340
    %s355 = sphi 0, %s341
    %s359 = sphi 0, %s359
    %s361 = sphi 0, %s359
    %s362 = sphi 0, %s361
    %s376 = sphi 0, %s362
    %s380 = sphi 0, %s380
    %s382 = sphi 0, %s380
    %s383 = sphi 0, %s382
    %s397 = sphi 0, %s383
    %s401 = sphi 0, %s401
    %s403 = sphi 0, %s401
    %s404 = sphi 0, %s403
    %s418 = sphi 0, %s404
    %s424 = sphi 0, %s426
    %s427 = sphi 0, %s424
    %s428 = sphi 0, %s427
    %s444 = sphi 0, %s428
  $region4: #{critic_forward.1} parent=0 // loop_header_branch
    %29 = sbr.rel (%p27) target = $region8
  $region5: #{critic_forward.1} parent=0 // loop_body
    %s31 = ssub.s32 %s26, 1
    %s32 = ssub.s32 %s26, 2
    %s33 = sadd.s32 %s26, 1
    %s34 = ssub.s32 %s26, %s33
    %p35 = scmp.eq.s32.totalorder %s34, 0
    %s37 = sadd.s32 %s36, 1
    %s38 = scalar_select %p35, %s36, %s37
    %p41 = pneg %p35
    %p42 = scmp.eq.s32.totalorder %s26, 1
    %p43 = por %p41, %p42
    %p44 = scmp.ne.s32.totalorder %s36, %s39
    %p45 = scmp.eq.s32.totalorder %s26, 0
    %p46 = por %p44, %p45
    %p47 = scmp.ne.s32.totalorder %s36, %s39
    %p48 = scmp.eq.s32.totalorder %s31, 1
    %p49 = por %p47, %p48
    %p50 = scmp.ne.s32.totalorder %s39, %s40
    %p51 = scmp.eq.s32.totalorder %s31, 0
    %p52 = por %p50, %p51
    %p53 = scmp.ne.s32.totalorder %s39, %s40
    %p54 = scmp.eq.s32.totalorder %s32, 1
    %p55 = por %p53, %p54
    %p57 = scmp.ne.s32.totalorder %s40, %s56
    %p58 = scmp.eq.s32.totalorder %s32, 0
    %p59 = por %p57, %p58
    %s60 = ssub.s32 %s26, %s33
    %p61 = scmp.eq.s32.totalorder %s60, 0
    %s63 = sadd.s32 %s62, 1
    %s64 = scalar_select %p61, %s62, %s63
    %p67 = pneg %p61
    %p68 = scmp.eq.s32.totalorder %s26, 1
    %p69 = por %p67, %p68
    %p70 = scmp.ne.s32.totalorder %s62, %s65
    %p71 = scmp.eq.s32.totalorder %s26, 0
    %p72 = por %p70, %p71
    %p73 = scmp.ne.s32.totalorder %s62, %s65
    %p74 = scmp.eq.s32.totalorder %s31, 1
    %p75 = por %p73, %p74
    %p76 = scmp.ne.s32.totalorder %s65, %s66
    %p77 = scmp.eq.s32.totalorder %s31, 0
    %p78 = por %p76, %p77
    %p79 = scmp.ne.s32.totalorder %s65, %s66
    %p80 = scmp.eq.s32.totalorder %s32, 1
    %p81 = por %p79, %p80
    %p83 = scmp.ne.s32.totalorder %s66, %s82
    %p84 = scmp.eq.s32.totalorder %s32, 0
    %p85 = por %p83, %p84
    %s87 = sadd.s32 %s86, 1
    %p90 = scmp.eq.s32.totalorder %s26, 1
    %p91 = scmp.ne.s32.totalorder %s86, %s88
    %p92 = scmp.eq.s32.totalorder %s26, 0
    %p93 = por %p91, %p92
    %p94 = scmp.ne.s32.totalorder %s86, %s88
    %p95 = scmp.eq.s32.totalorder %s31, 1
    %p96 = por %p94, %p95
    %p97 = scmp.ne.s32.totalorder %s88, %s89
    %p98 = scmp.eq.s32.totalorder %s31, 0
    %p99 = por %p97, %p98
    %p100 = scmp.ne.s32.totalorder %s88, %s89
    %p101 = scmp.eq.s32.totalorder %s32, 1
    %p102 = por %p100, %p101
    %p104 = scmp.ne.s32.totalorder %s89, %s103
    %p105 = scmp.eq.s32.totalorder %s32, 0
    %p106 = por %p104, %p105
    %s108 = sadd.s32 %s107, 1
    %p111 = scmp.eq.s32.totalorder %s26, 1
    %p112 = scmp.ne.s32.totalorder %s107, %s109
    %p113 = scmp.eq.s32.totalorder %s26, 0
    %p114 = por %p112, %p113
    %p115 = scmp.ne.s32.totalorder %s107, %s109
    %p116 = scmp.eq.s32.totalorder %s31, 1
    %p117 = por %p115, %p116
    %p118 = scmp.ne.s32.totalorder %s109, %s110
    %p119 = scmp.eq.s32.totalorder %s31, 0
    %p120 = por %p118, %p119
    %p121 = scmp.ne.s32.totalorder %s109, %s110
    %p122 = scmp.eq.s32.totalorder %s32, 1
    %p123 = por %p121, %p122
    %p125 = scmp.ne.s32.totalorder %s110, %s124
    %p126 = scmp.eq.s32.totalorder %s32, 0
    %p127 = por %p125, %p126
    %s129 = sadd.s32 %s128, 1
    %p132 = scmp.eq.s32.totalorder %s26, 1
    %p133 = scmp.ne.s32.totalorder %s128, %s130
    %p134 = scmp.eq.s32.totalorder %s26, 0
    %p135 = por %p133, %p134
    %p136 = scmp.ne.s32.totalorder %s128, %s130
    %p137 = scmp.eq.s32.totalorder %s31, 1
    %p138 = por %p136, %p137
    %p139 = scmp.ne.s32.totalorder %s130, %s131
    %p140 = scmp.eq.s32.totalorder %s31, 0
    %p141 = por %p139, %p140
    %p142 = scmp.ne.s32.totalorder %s130, %s131
    %p143 = scmp.eq.s32.totalorder %s32, 1
    %p144 = por %p142, %p143
    %p146 = scmp.ne.s32.totalorder %s131, %s145
    %p147 = scmp.eq.s32.totalorder %s32, 0
    %p148 = por %p146, %p147
    %s150 = sadd.s32 %s149, 1
    %p153 = scmp.eq.s32.totalorder %s26, 1
    %p154 = scmp.ne.s32.totalorder %s149, %s151
    %p155 = scmp.eq.s32.totalorder %s26, 0
    %p156 = por %p154, %p155
    %p157 = scmp.ne.s32.totalorder %s149, %s151
    %p158 = scmp.eq.s32.totalorder %s31, 1
    %p159 = por %p157, %p158
    %p160 = scmp.ne.s32.totalorder %s151, %s152
    %p161 = scmp.eq.s32.totalorder %s31, 0
    %p162 = por %p160, %p161
    %p163 = scmp.ne.s32.totalorder %s151, %s152
    %p164 = scmp.eq.s32.totalorder %s32, 1
    %p165 = por %p163, %p164
    %p167 = scmp.ne.s32.totalorder %s152, %s166
    %p168 = scmp.eq.s32.totalorder %s32, 0
    %p169 = por %p167, %p168
    %s171 = sadd.s32 %s170, 1
    %p174 = scmp.eq.s32.totalorder %s26, 1
    %p175 = scmp.ne.s32.totalorder %s170, %s172
    %p176 = scmp.eq.s32.totalorder %s26, 0
    %p177 = por %p175, %p176
    %p178 = scmp.ne.s32.totalorder %s170, %s172
    %p179 = scmp.eq.s32.totalorder %s31, 1
    %p180 = por %p178, %p179
    %p181 = scmp.ne.s32.totalorder %s172, %s173
    %p182 = scmp.eq.s32.totalorder %s31, 0
    %p183 = por %p181, %p182
    %p184 = scmp.ne.s32.totalorder %s172, %s173
    %p185 = scmp.eq.s32.totalorder %s32, 1
    %p186 = por %p184, %p185
    %p188 = scmp.ne.s32.totalorder %s173, %s187
    %p189 = scmp.eq.s32.totalorder %s32, 0
    %p190 = por %p188, %p189
    %s192 = sadd.s32 %s191, 1
    %p195 = scmp.eq.s32.totalorder %s26, 1
    %p196 = scmp.ne.s32.totalorder %s191, %s193
    %p197 = scmp.eq.s32.totalorder %s26, 0
    %p198 = por %p196, %p197
    %p199 = scmp.ne.s32.totalorder %s191, %s193
    %p200 = scmp.eq.s32.totalorder %s31, 1
    %p201 = por %p199, %p200
    %p202 = scmp.ne.s32.totalorder %s193, %s194
    %p203 = scmp.eq.s32.totalorder %s31, 0
    %p204 = por %p202, %p203
    %p205 = scmp.ne.s32.totalorder %s193, %s194
    %p206 = scmp.eq.s32.totalorder %s32, 1
    %p207 = por %p205, %p206
    %p209 = scmp.ne.s32.totalorder %s194, %s208
    %p210 = scmp.eq.s32.totalorder %s32, 0
    %p211 = por %p209, %p210
    %s213 = sadd.s32 %s212, 1
    %p216 = scmp.eq.s32.totalorder %s26, 1
    %p217 = scmp.ne.s32.totalorder %s212, %s214
    %p218 = scmp.eq.s32.totalorder %s26, 0
    %p219 = por %p217, %p218
    %p220 = scmp.ne.s32.totalorder %s212, %s214
    %p221 = scmp.eq.s32.totalorder %s31, 1
    %p222 = por %p220, %p221
    %p223 = scmp.ne.s32.totalorder %s214, %s215
    %p224 = scmp.eq.s32.totalorder %s31, 0
    %p225 = por %p223, %p224
    %p226 = scmp.ne.s32.totalorder %s214, %s215
    %p227 = scmp.eq.s32.totalorder %s32, 1
    %p228 = por %p226, %p227
    %p230 = scmp.ne.s32.totalorder %s215, %s229
    %p231 = scmp.eq.s32.totalorder %s32, 0
    %p232 = por %p230, %p231
    %s234 = sadd.s32 %s233, 1
    %p237 = scmp.eq.s32.totalorder %s26, 1
    %p238 = scmp.ne.s32.totalorder %s233, %s235
    %p239 = scmp.eq.s32.totalorder %s26, 0
    %p240 = por %p238, %p239
    %p241 = scmp.ne.s32.totalorder %s233, %s235
    %p242 = scmp.eq.s32.totalorder %s31, 1
    %p243 = por %p241, %p242
    %p244 = scmp.ne.s32.totalorder %s235, %s236
    %p245 = scmp.eq.s32.totalorder %s31, 0
    %p246 = por %p244, %p245
    %p247 = scmp.ne.s32.totalorder %s235, %s236
    %p248 = scmp.eq.s32.totalorder %s32, 1
    %p249 = por %p247, %p248
    %p251 = scmp.ne.s32.totalorder %s236, %s250
    %p252 = scmp.eq.s32.totalorder %s32, 0
    %p253 = por %p251, %p252
    %s255 = sadd.s32 %s254, 1
    %p258 = scmp.eq.s32.totalorder %s26, 1
    %p259 = scmp.ne.s32.totalorder %s254, %s256
    %p260 = scmp.eq.s32.totalorder %s26, 0
    %p261 = por %p259, %p260
    %p262 = scmp.ne.s32.totalorder %s254, %s256
    %p263 = scmp.eq.s32.totalorder %s31, 1
    %p264 = por %p262, %p263
    %p265 = scmp.ne.s32.totalorder %s256, %s257
    %p266 = scmp.eq.s32.totalorder %s31, 0
    %p267 = por %p265, %p266
    %p268 = scmp.ne.s32.totalorder %s256, %s257
    %p269 = scmp.eq.s32.totalorder %s32, 1
    %p270 = por %p268, %p269
    %p272 = scmp.ne.s32.totalorder %s257, %s271
    %p273 = scmp.eq.s32.totalorder %s32, 0
    %p274 = por %p272, %p273
    %s276 = sadd.s32 %s275, 1
    %p279 = scmp.eq.s32.totalorder %s26, 1
    %p280 = scmp.ne.s32.totalorder %s275, %s277
    %p281 = scmp.eq.s32.totalorder %s26, 0
    %p282 = por %p280, %p281
    %p283 = scmp.ne.s32.totalorder %s275, %s277
    %p284 = scmp.eq.s32.totalorder %s31, 1
    %p285 = por %p283, %p284
    %p286 = scmp.ne.s32.totalorder %s277, %s278
    %p287 = scmp.eq.s32.totalorder %s31, 0
    %p288 = por %p286, %p287
    %p289 = scmp.ne.s32.totalorder %s277, %s278
    %p290 = scmp.eq.s32.totalorder %s32, 1
    %p291 = por %p289, %p290
    %p293 = scmp.ne.s32.totalorder %s278, %s292
    %p294 = scmp.eq.s32.totalorder %s32, 0
    %p295 = por %p293, %p294
    %s297 = sadd.s32 %s296, 1
    %p300 = scmp.eq.s32.totalorder %s26, 1
    %p301 = scmp.ne.s32.totalorder %s296, %s298
    %p302 = scmp.eq.s32.totalorder %s26, 0
    %p303 = por %p301, %p302
    %p304 = scmp.ne.s32.totalorder %s296, %s298
    %p305 = scmp.eq.s32.totalorder %s31, 1
    %p306 = por %p304, %p305
    %p307 = scmp.ne.s32.totalorder %s298, %s299
    %p308 = scmp.eq.s32.totalorder %s31, 0
    %p309 = por %p307, %p308
    %p310 = scmp.ne.s32.totalorder %s298, %s299
    %p311 = scmp.eq.s32.totalorder %s32, 1
    %p312 = por %p310, %p311
    %p314 = scmp.ne.s32.totalorder %s299, %s313
    %p315 = scmp.eq.s32.totalorder %s32, 0
    %p316 = por %p314, %p315
    %s318 = sadd.s32 %s317, 1
    %p321 = scmp.eq.s32.totalorder %s26, 1
    %p322 = scmp.ne.s32.totalorder %s317, %s319
    %p323 = scmp.eq.s32.totalorder %s26, 0
    %p324 = por %p322, %p323
    %p325 = scmp.ne.s32.totalorder %s317, %s319
    %p326 = scmp.eq.s32.totalorder %s31, 1
    %p327 = por %p325, %p326
    %p328 = scmp.ne.s32.totalorder %s319, %s320
    %p329 = scmp.eq.s32.totalorder %s31, 0
    %p330 = por %p328, %p329
    %p331 = scmp.ne.s32.totalorder %s319, %s320
    %p332 = scmp.eq.s32.totalorder %s32, 1
    %p333 = por %p331, %p332
    %p335 = scmp.ne.s32.totalorder %s320, %s334
    %p336 = scmp.eq.s32.totalorder %s32, 0
    %p337 = por %p335, %p336
    %s339 = sadd.s32 %s338, 1
    %p342 = scmp.eq.s32.totalorder %s26, 1
    %p343 = scmp.ne.s32.totalorder %s338, %s340
    %p344 = scmp.eq.s32.totalorder %s26, 0
    %p345 = por %p343, %p344
    %p346 = scmp.ne.s32.totalorder %s338, %s340
    %p347 = scmp.eq.s32.totalorder %s31, 1
    %p348 = por %p346, %p347
    %p349 = scmp.ne.s32.totalorder %s340, %s341
    %p350 = scmp.eq.s32.totalorder %s31, 0
    %p351 = por %p349, %p350
    %p352 = scmp.ne.s32.totalorder %s340, %s341
    %p353 = scmp.eq.s32.totalorder %s32, 1
    %p354 = por %p352, %p353
    %p356 = scmp.ne.s32.totalorder %s341, %s355
    %p357 = scmp.eq.s32.totalorder %s32, 0
    %p358 = por %p356, %p357
    %s360 = sadd.s32 %s359, 1
    %p363 = scmp.eq.s32.totalorder %s26, 1
    %p364 = scmp.ne.s32.totalorder %s359, %s361
    %p365 = scmp.eq.s32.totalorder %s26, 0
    %p366 = por %p364, %p365
    %p367 = scmp.ne.s32.totalorder %s359, %s361
    %p368 = scmp.eq.s32.totalorder %s31, 1
    %p369 = por %p367, %p368
    %p370 = scmp.ne.s32.totalorder %s361, %s362
    %p371 = scmp.eq.s32.totalorder %s31, 0
    %p372 = por %p370, %p371
    %p373 = scmp.ne.s32.totalorder %s361, %s362
    %p374 = scmp.eq.s32.totalorder %s32, 1
    %p375 = por %p373, %p374
    %p377 = scmp.ne.s32.totalorder %s362, %s376
    %p378 = scmp.eq.s32.totalorder %s32, 0
    %p379 = por %p377, %p378
    %s381 = sadd.s32 %s380, 1
    %p384 = scmp.eq.s32.totalorder %s26, 1
    %p385 = scmp.ne.s32.totalorder %s380, %s382
    %p386 = scmp.eq.s32.totalorder %s26, 0
    %p387 = por %p385, %p386
    %p388 = scmp.ne.s32.totalorder %s380, %s382
    %p389 = scmp.eq.s32.totalorder %s31, 1
    %p390 = por %p388, %p389
    %p391 = scmp.ne.s32.totalorder %s382, %s383
    %p392 = scmp.eq.s32.totalorder %s31, 0
    %p393 = por %p391, %p392
    %p394 = scmp.ne.s32.totalorder %s382, %s383
    %p395 = scmp.eq.s32.totalorder %s32, 1
    %p396 = por %p394, %p395
    %p398 = scmp.ne.s32.totalorder %s383, %s397
    %p399 = scmp.eq.s32.totalorder %s32, 0
    %p400 = por %p398, %p399
    %s402 = sadd.s32 %s401, 1
    %p405 = scmp.eq.s32.totalorder %s26, 1
    %p406 = scmp.ne.s32.totalorder %s401, %s403
    %p407 = scmp.eq.s32.totalorder %s26, 0
    %p408 = por %p406, %p407
    %p409 = scmp.ne.s32.totalorder %s401, %s403
    %p410 = scmp.eq.s32.totalorder %s31, 1
    %p411 = por %p409, %p410
    %p412 = scmp.ne.s32.totalorder %s403, %s404
    %p413 = scmp.eq.s32.totalorder %s31, 0
    %p414 = por %p412, %p413
    %p415 = scmp.ne.s32.totalorder %s403, %s404
    %p416 = scmp.eq.s32.totalorder %s32, 1
    %p417 = por %p415, %p416
    %p419 = scmp.ne.s32.totalorder %s404, %s418
    %p420 = scmp.eq.s32.totalorder %s32, 0
    %p421 = por %p419, %p420
    %s422 = ssub.s32 %s26, %s33
    %p423 = scmp.eq.s32.totalorder %s422, 0
    %s425 = sadd.s32 %s424, 1
    %s426 = scalar_select %p423, %s424, %s425
    %p429 = pneg %p423
    %p430 = scmp.eq.s32.totalorder %s26, 1
    %p431 = por %p429, %p430
    %p432 = scmp.ne.s32.totalorder %s424, %s427
    %p433 = scmp.eq.s32.totalorder %s26, 0
    %p434 = por %p432, %p433
    %p435 = scmp.ne.s32.totalorder %s424, %s427
    %p436 = scmp.eq.s32.totalorder %s31, 1
    %p437 = por %p435, %p436
    %p438 = scmp.ne.s32.totalorder %s427, %s428
    %p439 = scmp.eq.s32.totalorder %s31, 0
    %p440 = por %p438, %p439
    %p441 = scmp.ne.s32.totalorder %s427, %s428
    %p442 = scmp.eq.s32.totalorder %s32, 1
    %p443 = por %p441, %p442
    %p445 = scmp.ne.s32.totalorder %s428, %s444
    %p446 = scmp.eq.s32.totalorder %s32, 0
    %p447 = por %p445, %p446
    %p448 = scmp.le.s32.totalorder 1, %s26
    %p449 = scmp.lt.s32.totalorder %s26, 3
    %p450 = pnand %p448, %p449
    %p451 = pneg %p450
    // Predicated region
    $region9: #{critic_forward.1} parent=5 // pred_check
      _
    $region10: #{critic_forward.1} parent=5 // pred_check_branch
      %453 = sbr.rel (%p450) target = $region12
    $region11: #{critic_forward.1} parent=5 // pred_region
      %s454 = ssub.s32 %s26, 1
      // Predicated region
      $region13: #{critic_forward.1} parent=11 // pred_check
        %p455 = pneg %p99
      $region14: #{critic_forward.1} parent=11 // pred_check_branch
        %457 = sbr.rel (%p455) target = $region16
      $region15: #{critic_forward.1} parent=11 // pred_region
        _
      $region16: #{critic_forward.1} parent=11 // pred_fallthru
        _
      // Predicated region
      $region17: #{critic_forward.1} parent=11 // pred_check
        %p458 = pneg %p120
      $region18: #{critic_forward.1} parent=11 // pred_check_branch
        %460 = sbr.rel (%p458) target = $region20
      $region19: #{critic_forward.1} parent=11 // pred_region
        _
      $region20: #{critic_forward.1} parent=11 // pred_fallthru
        _
      // Predicated region
      $region21: #{critic_forward.1} parent=11 // pred_check
        %p461 = pneg %p141
      $region22: #{critic_forward.1} parent=11 // pred_check_branch
        %463 = sbr.rel (%p461) target = $region24
      $region23: #{critic_forward.1} parent=11 // pred_region
        _
      $region24: #{critic_forward.1} parent=11 // pred_fallthru
        _
      // Predicated region
      $region25: #{critic_forward.1} parent=11 // pred_check
        %p464 = pneg %p162
      $region26: #{critic_forward.1} parent=11 // pred_check_branch
        %466 = sbr.rel (%p464) target = $region28
      $region27: #{critic_forward.1} parent=11 // pred_region
        _
      $region28: #{critic_forward.1} parent=11 // pred_fallthru
        _
      // Predicated region
      $region29: #{critic_forward.1} parent=11 // pred_check
        %p467 = pneg %p183
      $region30: #{critic_forward.1} parent=11 // pred_check_branch
        %469 = sbr.rel (%p467) target = $region32
      $region31: #{critic_forward.1} parent=11 // pred_region
        _
      $region32: #{critic_forward.1} parent=11 // pred_fallthru
        _
      // Predicated region
      $region33: #{critic_forward.1} parent=11 // pred_check
        %p470 = pneg %p204
      $region34: #{critic_forward.1} parent=11 // pred_check_branch
        %472 = sbr.rel (%p470) target = $region36
      $region35: #{critic_forward.1} parent=11 // pred_region
        _
      $region36: #{critic_forward.1} parent=11 // pred_fallthru
        _
      // Predicated region
      $region37: #{critic_forward.1} parent=11 // pred_check
        %p473 = pneg %p225
      $region38: #{critic_forward.1} parent=11 // pred_check_branch
        %475 = sbr.rel (%p473) target = $region40
      $region39: #{critic_forward.1} parent=11 // pred_region
        _
      $region40: #{critic_forward.1} parent=11 // pred_fallthru
        _
      // Predicated region
      $region41: #{critic_forward.1} parent=11 // pred_check
        %p476 = pneg %p246
      $region42: #{critic_forward.1} parent=11 // pred_check_branch
        %478 = sbr.rel (%p476) target = $region44
      $region43: #{critic_forward.1} parent=11 // pred_region
        _
      $region44: #{critic_forward.1} parent=11 // pred_fallthru
        _
      // Predicated region
      $region45: #{critic_forward.1} parent=11 // pred_check
        %p479 = pneg %p267
      $region46: #{critic_forward.1} parent=11 // pred_check_branch
        %481 = sbr.rel (%p479) target = $region48
      $region47: #{critic_forward.1} parent=11 // pred_region
        _
      $region48: #{critic_forward.1} parent=11 // pred_fallthru
        _
      // Predicated region
      $region49: #{critic_forward.1} parent=11 // pred_check
        %p482 = pneg %p288
      $region50: #{critic_forward.1} parent=11 // pred_check_branch
        %484 = sbr.rel (%p482) target = $region52
      $region51: #{critic_forward.1} parent=11 // pred_region
        _
      $region52: #{critic_forward.1} parent=11 // pred_fallthru
        _
      // Predicated region
      $region53: #{critic_forward.1} parent=11 // pred_check
        %p485 = pneg %p309
      $region54: #{critic_forward.1} parent=11 // pred_check_branch
        %487 = sbr.rel (%p485) target = $region56
      $region55: #{critic_forward.1} parent=11 // pred_region
        _
      $region56: #{critic_forward.1} parent=11 // pred_fallthru
        _
      // Predicated region
      $region57: #{critic_forward.1} parent=11 // pred_check
        %p488 = pneg %p330
      $region58: #{critic_forward.1} parent=11 // pred_check_branch
        %490 = sbr.rel (%p488) target = $region60
      $region59: #{critic_forward.1} parent=11 // pred_region
        _
      $region60: #{critic_forward.1} parent=11 // pred_fallthru
        _
      // Predicated region
      $region61: #{critic_forward.1} parent=11 // pred_check
        %p491 = pneg %p351
      $region62: #{critic_forward.1} parent=11 // pred_check_branch
        %493 = sbr.rel (%p491) target = $region64
      $region63: #{critic_forward.1} parent=11 // pred_region
        _
      $region64: #{critic_forward.1} parent=11 // pred_fallthru
        _
      // Predicated region
      $region65: #{critic_forward.1} parent=11 // pred_check
        %p494 = pneg %p372
      $region66: #{critic_forward.1} parent=11 // pred_check_branch
        %496 = sbr.rel (%p494) target = $region68
      $region67: #{critic_forward.1} parent=11 // pred_region
        _
      $region68: #{critic_forward.1} parent=11 // pred_fallthru
        _
      // Predicated region
      $region69: #{critic_forward.1} parent=11 // pred_check
        %p497 = pneg %p393
      $region70: #{critic_forward.1} parent=11 // pred_check_branch
        %499 = sbr.rel (%p497) target = $region72
      $region71: #{critic_forward.1} parent=11 // pred_region
        _
      $region72: #{critic_forward.1} parent=11 // pred_fallthru
        _
      // Predicated region
      $region73: #{critic_forward.1} parent=11 // pred_check
        %p500 = pneg %p414
      $region74: #{critic_forward.1} parent=11 // pred_check_branch
        %502 = sbr.rel (%p500) target = $region76
      $region75: #{critic_forward.1} parent=11 // pred_region
        _
      $region76: #{critic_forward.1} parent=11 // pred_fallthru
        _
    $region12: #{critic_forward.1} parent=5 // pred_fallthru
      _
    %p503 = scmp.lt.s32.totalorder %s26, 2
    // Predicated region
    $region77: #{critic_forward.1} parent=5 // pred_check
      %p504 = pneg %p503
    $region78: #{critic_forward.1} parent=5 // pred_check_branch
      %506 = sbr.rel (%p504) target = $region80
    $region79: #{critic_forward.1} parent=5 // pred_region
      // Predicated region
      $region81: #{critic_forward.1} parent=79 // pred_check
        %p507 = pneg %p46
      $region82: #{critic_forward.1} parent=79 // pred_check_branch
        %509 = sbr.rel (%p507) target = $region84
      $region83: #{critic_forward.1} parent=79 // pred_region
        %p510 = scmp.lt.s32.totalorder %s26, 1
        %s511 = scalar_select %p510, %s26, 1
        %s512 = smul.addr %s511, 8
        %s513 = scalar_lea.vmem %s0, %s512
      $region84: #{critic_forward.1} parent=79 // pred_fallthru
        _
      // Predicated region
      $region85: #{critic_forward.1} parent=79 // pred_check
        %p514 = pneg %p72
      $region86: #{critic_forward.1} parent=79 // pred_check_branch
        %516 = sbr.rel (%p514) target = $region88
      $region87: #{critic_forward.1} parent=79 // pred_region
        %p517 = scmp.lt.s32.totalorder %s26, 1
        %s518 = scalar_select %p517, %s26, 1
        %s519 = smul.addr %s518, 8
        %s520 = scalar_lea.vmem %s1, %s519
      $region88: #{critic_forward.1} parent=79 // pred_fallthru
        _
    $region80: #{critic_forward.1} parent=5 // pred_fallthru
      _
    %p521 = scmp.le.s32.totalorder 1, %s26
    %p522 = scmp.lt.s32.totalorder %s26, 3
    %p523 = pnand %p521, %p522
    %p524 = pneg %p523
    // Predicated region
    $region89: #{critic_forward.1} parent=5 // pred_check
      _
    $region90: #{critic_forward.1} parent=5 // pred_check_branch
      %526 = sbr.rel (%p523) target = $region92
    $region91: #{critic_forward.1} parent=5 // pred_region
      %s527 = ssub.s32 %s26, 1
      %p528 = scmp.lt.s32.totalorder %s31, 1
      %s529 = scalar_select %p528, %s31, 1
      %s530 = smul.addr %s529, 8
      %s531 = scalar_lea.vmem %s0, %s530
      %p532 = pneg %p52
      %p533 = pneg %p49
      %p534 = scmp.lt.s32.totalorder %s31, 1
      %s535 = scalar_select %p534, %s31, 1
      %s536 = smul.addr %s535, 8
      %s537 = scalar_lea.vmem %s1, %s536
      %p538 = pneg %p78
      %p539 = pneg %p75
      %p540 = pneg %p99
      %p541 = pneg %p96
      %p542 = pneg %p120
      %p543 = pneg %p117
      %p544 = pneg %p141
      %p545 = pneg %p138
      %p546 = pneg %p162
      %p547 = pneg %p159
      %p548 = pneg %p183
      %p549 = pneg %p180
      %p550 = pneg %p204
      %p551 = pneg %p201
      %p552 = pneg %p225
      %p553 = pneg %p222
      %p554 = pneg %p246
      %p555 = pneg %p243
      %p556 = pneg %p267
      %p557 = pneg %p264
      %p558 = pneg %p288
      %p559 = pneg %p285
      %p560 = pneg %p309
      %p561 = pneg %p306
      %p562 = pneg %p330
      %p563 = pneg %p327
      %p564 = pneg %p351
      %p565 = pneg %p348
      %p566 = pneg %p372
      %p567 = pneg %p369
      %p568 = pneg %p393
      %p569 = pneg %p390
      %p570 = pneg %p414
      %p571 = pneg %p411
      %p572 = pneg %p440
      %p573 = pneg %p437
      %p574 = scmp.lt.s32.totalorder %s31, 1
      %s575 = scalar_select %p574, %s31, 1
      %s576 = scalar_lea.vmem %s18, %s575
      %p577 = scmp.lt.s32.totalorder %s31, 1
      %s578 = scalar_select %p577, %s31, 1
      %s579 = smul.addr %s578, 8
      %s580 = scalar_lea.vmem %s0, %s579
      %p581 = scmp.lt.s32.totalorder %s31, 1
      %s582 = scalar_select %p581, %s31, 1
      %s583 = smul.addr %s582, 8
      %s584 = scalar_lea.vmem %s1, %s583
      %p585 = scmp.lt.s32.totalorder %s31, 1
      %s586 = scalar_select %p585, %s31, 1
      %s587 = scalar_lea.vmem %s18, %s586
      %v589 = vld [vmem:[%s584] sm:$0xff]
      %v590 = vpack.c.bf16 %v589, %v589
      %v591 = vld [vmem:[%s14] sm:$0x3]
      %v592 = vld [vmem:[%s15] sm:$0x1]
      %v594 = vperm.slane %v592, 0
      %vm596 = vcmask 31744
      %v598 = vsel %vm596, %v590, 0
      %vm600 = vcmask 1041408
      %v602 = vsel %vm600, %v591, 0
      %604 = vmatpush.bf16.msra.mxu0 0
      %605 = vmatpush.bf16.msra.mxu0 0
      %606 = vmatpush.bf16.msra.mxu0 0
      %607 = vmatpush.bf16.msra.mxu0 0
      %608 = vmatpush.bf16.msra.mxu0 0
      %609 = vmatpush.bf16.msra.mxu0 0
      %610 = vmatpush.bf16.msra.mxu0 0
      %611 = vmatpush.bf16.msra.mxu0 %v602
      %612 = vmatmul.bf16.gmra.mxu0 %v598
      %v613 = vpop.f32.mrf.mxu0
      %v614 = vadd.f32 %v594, %v613
      %v615 = vpop.f32.mrf.mxu0
      %616 = vdwg.mxu0
      %v617 = vmax.f32 %v614, 0.0
      %v618 = vld [vmem:[%s580] sm:$0xff]
      %v619 = vpack.c.bf16 %v618, %v618
      %v620 = vld [vmem:[%s2] sm:$0xf]
      %v621 = vld [vmem:[%s2 + $0x4] sm:$0xf]
      %v622 = vld [vmem:[%s2 + $0x8] sm:$0xf]
      %v623 = vld [vmem:[%s2 + $0xc] sm:$0xf]
      %v624 = vld [vmem:[%s3] sm:$0x1]
      %v626 = vperm.slane %v624, 0
      %v632 = vunpack.c.l.b16 %v620
      %v633 = vunpack.c.l.b16 %v621
      %v634 = vunpack.c.l.b16 %v622
      %v635 = vunpack.c.l.b16 %v623
      %v636 = vpack.c.b16 %v633, %v632
      %v637 = vpack.c.b16 %v635, %v634
      %vm640 = vcmask 261120
      %v642 = vsel %vm640, %v619, 0
      %644 = vmatpush.bf16.msra.mxu0 0
      %645 = vmatpush.bf16.msra.mxu0 0
      %646 = vmatpush.bf16.msra.mxu0 0
      %647 = vmatpush.bf16.msra.mxu0 0
      %648 = vmatpush.bf16.msra.mxu0 0
      %649 = vmatpush.bf16.msra.mxu0 0
      %650 = vmatpush.bf16.msra.mxu0 %v637
      %651 = vmatpush.bf16.msra.mxu0 %v636
      %652 = vmatmul.bf16.gmra.mxu0 %v642
      %v653 = vpop.f32.mrf.mxu0
      %v654 = vadd.f32 %v626, %v653
      %v655 = vpop.f32.mrf.mxu0
      %656 = vdwg.mxu0
      %v657 = vld [vmem:[%s4] sm:$0x1]
      %v658 = vld [vmem:[%s5] sm:$0x1]
      %vm659 = vcmask 523264
      %v660 = vsel %vm659, %v654, 0.0
      %661 = vadd.xlane.f32.xlu0 %v660
      %v662 = vpop.xlane.xlu0 %661
      %v663 = vmul.f32 %v654, %v654
      %v664 = vsel %vm659, %v663, 0.0
      %665 = vadd.xlane.f32.xlu0 %v664
      %v666 = vpop.xlane.xlu0 %665
      %v667 = vmul.f32 %v662, 0.015625
      %v668 = vmul.f32 %v666, 0.015625
      %v669 = vmul.f32 %v667, %v667
      %v670 = vsub.f32 %v668, %v669
      %v671 = vmax.f32 %v670, 0.0
      %v672 = vadd.f32 %v671, 1e-05
      %v673 = vrsqrt.pop %v672
      %v674 = vmul.f32 %v673, %v672
      %v675 = vmul.f32 %v674, %v673
      %v676 = vmul.f32 0.5, %v675
      %v677 = vsub.f32 1.5, %v676
      %v678 = vmul.f32 %v673, %v677
      %vm679 = vweird.f32 %v672
      %vm680 = vweird.f32 %v673
      %vm681 = vmor %vm679, %vm680
      %v682 = vsel %vm681, %v673, %v678
      %v683 = vsub.f32 %v654, %v667
      %v684 = vmul.f32 %v683, %v682
      %v686 = vperm.slane %v657, 0
      %v688 = vmul.f32 %v684, %v686
      %v690 = vperm.slane %v658, 0
      %v692 = vadd.f32 %v688, %v690
      %v693 = vmax.f32 %v692, 0.0
      %v694 = vpack.c.bf16 %v693, %v693
      %v695 = vld [vmem:[%s6] sm:$0xf]
      %v696 = vld [vmem:[%s6 + $0x4] sm:$0xf]
      %v697 = vld [vmem:[%s6 + $0x8] sm:$0xf]
      %v698 = vld [vmem:[%s6 + $0xc] sm:$0xf]
      %v699 = vld [vmem:[%s6 + $0x10] sm:$0xf]
      %v700 = vld [vmem:[%s6 + $0x14] sm:$0xf]
      %v701 = vld [vmem:[%s6 + $0x18] sm:$0xf]
      %v702 = vld [vmem:[%s6 + $0x1c] sm:$0xf]
      %v703 = vld [vmem:[%s7] sm:$0x1]
      %v705 = vperm.slane %v703, 0
      %v715 = vunpack.c.l.b16 %v695
      %v716 = vunpack.c.l.b16 %v696
      %v717 = vunpack.c.l.b16 %v697
      %v718 = vunpack.c.l.b16 %v698
      %v719 = vunpack.c.l.b16 %v699
      %v720 = vunpack.c.l.b16 %v700
      %v721 = vunpack.c.l.b16 %v701
      %v722 = vunpack.c.l.b16 %v702
      %v723 = vpack.c.b16 %v716, %v715
      %v724 = vpack.c.b16 %v718, %v717
      %v725 = vpack.c.b16 %v720, %v719
      %v726 = vpack.c.b16 %v722, %v721
      %v732 = vsel %vm659, %v694, 0
      %734 = vmatpush.bf16.msra.mxu0 0
      %735 = vmatpush.bf16.msra.mxu0 0
      %736 = vmatpush.bf16.msra.mxu0 0
      %737 = vmatpush.bf16.msra.mxu0 0
      %738 = vmatpush.bf16.msra.mxu0 %v726
      %739 = vmatpush.bf16.msra.mxu0 %v725
      %740 = vmatpush.bf16.msra.mxu0 %v724
      %741 = vmatpush.bf16.msra.mxu0 %v723
      %742 = vmatmul.bf16.gmra.mxu0 %v732
      %v743 = vpop.f32.mrf.mxu0
      %v744 = vadd.f32 %v705, %v743
      %v745 = vpop.f32.mrf.mxu0
      %746 = vdwg.mxu0
      %v747 = vld [vmem:[%s8] sm:$0x1]
      %v748 = vld [vmem:[%s9] sm:$0x1]
      %v749 = vsel %vm659, %v744, 0.0
      %750 = vadd.xlane.f32.xlu0 %v749
      %v751 = vpop.xlane.xlu0 %750
      %v752 = vmul.f32 %v744, %v744
      %v753 = vsel %vm659, %v752, 0.0
      %754 = vadd.xlane.f32.xlu0 %v753
      %v755 = vpop.xlane.xlu0 %754
      %v756 = vmul.f32 %v751, 0.015625
      %v757 = vmul.f32 %v755, 0.015625
      %v758 = vmul.f32 %v756, %v756
      %v759 = vsub.f32 %v757, %v758
      %v760 = vmax.f32 %v759, 0.0
      %v761 = vadd.f32 %v760, 1e-05
      %v762 = vrsqrt.pop %v761
      %v763 = vmul.f32 %v762, %v761
      %v764 = vmul.f32 %v763, %v762
      %v765 = vmul.f32 0.5, %v764
      %v766 = vsub.f32 1.5, %v765
      %v767 = vmul.f32 %v762, %v766
      %vm768 = vweird.f32 %v761
      %vm769 = vweird.f32 %v762
      %vm770 = vmor %vm768, %vm769
      %v771 = vsel %vm770, %v762, %v767
      %v772 = vsub.f32 %v744, %v756
      %v773 = vmul.f32 %v772, %v771
      %v775 = vperm.slane %v747, 0
      %v777 = vmul.f32 %v773, %v775
      %v779 = vperm.slane %v748, 0
      %v781 = vadd.f32 %v777, %v779
      %v782 = vmax.f32 %v781, 0.0
      %v783 = vpack.c.bf16 %v782, %v782
      %v784 = vld [vmem:[%s10] sm:$0xf]
      %v785 = vld [vmem:[%s10 + $0x4] sm:$0xf]
      %v786 = vld [vmem:[%s10 + $0x8] sm:$0xf]
      %v787 = vld [vmem:[%s10 + $0xc] sm:$0xf]
      %v788 = vld [vmem:[%s10 + $0x10] sm:$0xf]
      %v789 = vld [vmem:[%s10 + $0x14] sm:$0xf]
      %v790 = vld [vmem:[%s10 + $0x18] sm:$0xf]
      %v791 = vld [vmem:[%s10 + $0x1c] sm:$0xf]
      %v792 = vld [vmem:[%s11] sm:$0x1]
      %v794 = vperm.slane %v792, 0
      %v804 = vunpack.c.l.b16 %v784
      %v805 = vunpack.c.l.b16 %v785
      %v806 = vunpack.c.l.b16 %v786
      %v807 = vunpack.c.l.b16 %v787
      %v808 = vunpack.c.l.b16 %v788
      %v809 = vunpack.c.l.b16 %v789
      %v810 = vunpack.c.l.b16 %v790
      %v811 = vunpack.c.l.b16 %v791
      %v812 = vpack.c.b16 %v805, %v804
      %v813 = vpack.c.b16 %v807, %v806
      %v814 = vpack.c.b16 %v809, %v808
      %v815 = vpack.c.b16 %v811, %v810
      %v821 = vsel %vm659, %v783, 0
      %823 = vmatpush.bf16.msra.mxu0 0
      %824 = vmatpush.bf16.msra.mxu0 0
      %825 = vmatpush.bf16.msra.mxu0 0
      %826 = vmatpush.bf16.msra.mxu0 0
      %827 = vmatpush.bf16.msra.mxu0 %v815
      %828 = vmatpush.bf16.msra.mxu0 %v814
      %829 = vmatpush.bf16.msra.mxu0 %v813
      %830 = vmatpush.bf16.msra.mxu0 %v812
      %831 = vmatmul.bf16.gmra.mxu0 %v821
      %v832 = vpop.f32.mrf.mxu0
      %v833 = vadd.f32 %v794, %v832
      %v834 = vpop.f32.mrf.mxu0
      %835 = vdwg.mxu0
      %v836 = vld [vmem:[%s12] sm:$0x1]
      %v837 = vld [vmem:[%s13] sm:$0x1]
      %v838 = vsel %vm640, %v833, 0.0
      %839 = vadd.xlane.f32.xlu0 %v838
      %v840 = vpop.xlane.xlu0 %839
      %v841 = vmul.f32 %v833, %v833
      %v842 = vsel %vm640, %v841, 0.0
      %843 = vadd.xlane.f32.xlu0 %v842
      %v844 = vpop.xlane.xlu0 %843
      %v845 = vmul.f32 %v840, 0.03125
      %v846 = vmul.f32 %v844, 0.03125
      %v847 = vmul.f32 %v845, %v845
      %v848 = vsub.f32 %v846, %v847
      %v849 = vmax.f32 %v848, 0.0
      %v850 = vadd.f32 %v849, 1e-05
      %v851 = vrsqrt.pop %v850
      %v852 = vmul.f32 %v851, %v850
      %v853 = vmul.f32 %v852, %v851
      %v854 = vmul.f32 0.5, %v853
      %v855 = vsub.f32 1.5, %v854
      %v856 = vmul.f32 %v851, %v855
      %vm857 = vweird.f32 %v850
      %vm858 = vweird.f32 %v851
      %vm859 = vmor %vm857, %vm858
      %v860 = vsel %vm859, %v851, %v856
      %v861 = vsub.f32 %v833, %v845
      %v862 = vmul.f32 %v861, %v860
      %v864 = vperm.slane %v836, 0
      %v866 = vmul.f32 %v862, %v864
      %v868 = vperm.slane %v837, 0
      %v870 = vadd.f32 %v866, %v868
      %v871 = vadd.f32 %v870, %v617
      %v872 = vmax.f32 %v871, 0.0
      %v873 = vld [vmem:[%s16] sm:$0x1]
      %v874 = vld [vmem:[#allocation2] sm:$0x1]
      %876 = vset.pattern.permute.xlu0 0
      %877 = vperm.xlu0 %876, %v874
      %v878 = vpop.permute.xlu0 %877
      %v880 = vperm.slane %v878, 0
      %v882 = vsel %vm640, %v873, 0
      %v885 = vsel %vm640, %v872, 0
      %887 = vmatpush.xpose.msra.mxu0 0.0
      %888 = vmatpush.xpose.msra.mxu0 0.0
      %889 = vmatpush.xpose.msra.mxu0 0.0
      %890 = vmatpush.xpose.msra.mxu0 0.0
      %891 = vmatpush.xpose.msra.mxu0 0.0
      %892 = vmatpush.xpose.msra.mxu0 0.0
      %893 = vmatpush.xpose.msra.mxu0 0.0
      %894 = vmatpush.xpose.msra.mxu0 0.0
      %895 = vmatpush.xpose.msra.mxu0 0.0
      %896 = vmatpush.xpose.msra.mxu0 0.0
      %897 = vmatpush.xpose.msra.mxu0 0.0
      %898 = vmatpush.xpose.msra.mxu0 0.0
      %899 = vmatpush.xpose.msra.mxu0 0.0
      %900 = vmatpush.xpose.msra.mxu0 0.0
      %901 = vmatpush.xpose.msra.mxu0 0.0
      %902 = vmatpush.xpose.msra.mxu0 %v885
      %903 = vmatmul.f32.gmra.mxu0 %v882
      %v904 = vpop.f32.mrf.mxu0
      %v905 = vadd.f32 %v880, %v904
      %906 = vdwg.mxu0
      %vm907 = vcmask 57344
      %908 = vst.msk [vmem:[%s587] sm:$0x1] %vm907, %v905
      %p909 = scmp.lt.s32.totalorder %s31, 1
      %s910 = scalar_select %p909, %s31, 1
      %s911 = scalar_lea.vmem %s18, %s910
      // Predicated region
      $region93: #{critic_forward.1} parent=91 // pred_check
        %p912 = pneg %p437
      $region94: #{critic_forward.1} parent=91 // pred_check_branch
        %914 = sbr.rel (%p912) target = $region96
      $region95: #{critic_forward.1} parent=91 // pred_region
        _
      $region96: #{critic_forward.1} parent=91 // pred_fallthru
        _
    $region92: #{critic_forward.1} parent=5 // pred_fallthru
      _
    %p915 = scmp.le.s32.totalorder 2, %s26
    // Predicated region
    $region97: #{critic_forward.1} parent=5 // pred_check
      %p916 = pneg %p915
    $region98: #{critic_forward.1} parent=5 // pred_check_branch
      %918 = sbr.rel (%p916) target = $region100
    $region99: #{critic_forward.1} parent=5 // pred_region
      %s919 = ssub.s32 %s26, 2
      // Predicated region
      $region101: #{critic_forward.1} parent=99 // pred_check
        %p920 = pneg %p443
      $region102: #{critic_forward.1} parent=99 // pred_check_branch
        %922 = sbr.rel (%p920) target = $region104
      $region103: #{critic_forward.1} parent=99 // pred_region
        %p923 = scmp.lt.s32.totalorder %s32, 1
        %s924 = scalar_select %p923, %s32, 1
        %s925 = scalar_lea.vmem %s18, %s924
      $region104: #{critic_forward.1} parent=99 // pred_fallthru
        _
    $region100: #{critic_forward.1} parent=5 // pred_fallthru
      _
  $region6: #{critic_forward.1} parent=0 // loop_footer
    %s30 = sadd.s32 1, %s26
  $region7: #{critic_forward.1} parent=0 // loop_footer_branch
    %25 = sbr.rel target = $region3
  $region8: #{critic_forward.1} parent=0 // loop_exit
    _

</llo_original>
